<compile_context>
chip_gen: v7x
topology: tpu7x:2x2x1
jax: 0.10.0
libtpu: 0.0.40
codegen_flags: <defaults>
</compile_context>

<pallas_src>
import jax
import jax.numpy as jnp
from jax import lax
from jax.experimental import pallas as pl
from jax.experimental.pallas import tpu as pltpu

SOM_X = 10
SOM_Y = 10
_DPAD = 128      # lane-padded feature width of the x slab inside the kernel
_MPAD = 128      # lane-padded SOM map size (SOM_X*SOM_Y = 100 -> 128)
_MAX_TB = 2048   # max batch tile (per-tile VMEM is only ~a few MB even at 2048)


def _round_up(x, m):
    return (x + m - 1) // m * m


def make_som_dagmm_forward(emb_tables, som_weights, n_cont,
                           embedding=True, numerical=False):
    """Precompute fused weights once, return a jitted forward(x_cat, x_cont, rec_data)."""
    assert embedding and not numerical, "kernel implements embedding=True, numerical=False"

    vocab_sizes = tuple(int(t.shape[0]) for t in emb_tables)
    emb_dims = tuple(int(t.shape[1]) for t in emb_tables)
    n_emb = len(emb_tables)
    d_emb = int(sum(emb_dims))
    D = d_emb + n_cont
    som_x, som_y, som_d = som_weights.shape
    assert (som_x, som_y) == (SOM_X, SOM_Y) and som_d == D
    M = som_x * som_y
    assert D + 2 <= _DPAD and M <= _MPAD

    # fused-input (U) column layout: [x_cont | onehot_0 | ... | onehot_{n-1} | bias(=1) | pad]
    cat_offs, o = [], n_cont
    for v in vocab_sizes:
        cat_offs.append(o)
        o += v
    bias_col = o
    K_pad = _round_up(bias_col + 1, 8)
    K_hi = K_pad - n_cont        # width of the one-hot/bias slab built in-kernel

    # x column layout (torch.cat([x_cat_emb, x_cont], -1)): [emb_0 | ... | emb_{n-1} | x_cont]
    emb_offs, e = [], 0
    for d in emb_dims:
        emb_offs.append(e)
        e += d

    # packed output layout: cols [0,D) = x, col D = winner_row/10, col D+1 = winner_col/10
    OUT_W = _round_up(D + 2, 8)

    # --- one-time glue: fused weight matrix W_all = [P | S]  (K_pad, 256) ---
    P = jnp.zeros((K_pad, _DPAD), jnp.float32)
    P = P.at[jnp.arange(n_cont), d_emb + jnp.arange(n_cont)].set(1.0)
    for t, co, eo, ed in zip(emb_tables, cat_offs, emb_offs, emb_dims):
        P = P.at[co:co + t.shape[0], eo:eo + ed].set(t.astype(jnp.float32))

    Wf = som_weights.reshape(M, D).astype(jnp.float32)
    w_sq = jnp.sum(Wf * Wf, axis=1)                              # (M,)
    S_core = jnp.dot(P[:, :D], -2.0 * Wf.T)                      # (K_pad, M)
    S = jnp.zeros((K_pad, _MPAD), jnp.float32).at[:, :M].set(S_core)
    S = S.at[bias_col, :M].set(w_sq)                             # bias row carries |w_m|^2
    S = S.at[bias_col, M:].set(1e30)                             # pad map cells never win

    W_all = jax.device_put(jnp.concatenate([P, S], axis=1))      # (K_pad, 256)
    cat_offs_arr = jnp.asarray(cat_offs, jnp.int32)

    def _make_kernel(tb):
        def kernel(x_cat_ref, x_cont_ref, w_ref, out_ref):
            # one-hot / bias half of U, built directly at width K_hi (lanes n_cont..K_pad)
            lane_hi = lax.broadcasted_iota(jnp.int32, (tb, K_hi), 1) + n_cont
            hi = (lane_hi == bias_col).astype(jnp.float32)
            x_cat = x_cat_ref[...]                       # already shifted by cat_offs on host
            for i in range(n_emb):
                hi = hi + (lane_hi == x_cat[:, i:i + 1]).astype(jnp.float32)
            # widen x_cont in-kernel instead of host-padding it to K_pad
            u = jnp.concatenate([x_cont_ref[...], hi], axis=-1)          # (tb, K_pad)

            # single MXU push: embedding/concat projector + SOM distance scores
            y = jnp.dot(u, w_ref[...], preferred_element_type=jnp.float32)   # (tb, 256)
            x_pad = y[:, :_DPAD]                                             # (tb, 128)
            score = y[:, _DPAD:]                                             # (tb, 128)

            # first-argmin over the (padded) SOM map
            dmin = jnp.min(score, axis=-1, keepdims=True)
            lane_m = lax.broadcasted_iota(jnp.int32, (tb, _MPAD), 1)
            flat = jnp.min(jnp.where(score <= dmin, lane_m, _MPAD),
                           axis=-1, keepdims=True).astype(jnp.float32)       # (tb, 1)

            # in-kernel winner coords (float path; flat <= 99 so f32 is exact)
            q = jnp.floor(flat / float(SOM_Y))
            wx = q / 10.0                                # normalize_tuple(., 10)
            wy = (flat - q * float(SOM_Y)) / 10.0

            # compact lane-dense packed output (OUT_W lanes instead of 128)
            lane_o = lax.broadcasted_iota(jnp.int32, (tb, OUT_W), 1)
            out = x_pad[:, :OUT_W]
            out = jnp.where(lane_o == D, wx, out)
            out = jnp.where(lane_o == D + 1, wy, out)
            out_ref[...] = out
        return kernel

    @jax.jit
    def forward(x_cat, x_cont, rec_data):
        B = x_cat.shape[0]
        assert x_cat.shape[1] == n_emb and x_cont.shape[1] == n_cont

        # Big tile to amortize per-grid-step overhead, but guarantee >=2 tiles for
        # large B so both v7x TensorCores get work (no-op on single-TC v5e/v6e).
        TB = min(_MAX_TB, _round_up(pl.cdiv(B, 2), 8))
        B_pad = _round_up(B, TB)

        x_cat_p = x_cat.astype(jnp.int32) + cat_offs_arr[None, :]
        x_cont_p = x_cont.astype(jnp.float32)
        if B_pad != B:                       # only pad the remainder case
            x_cat_p = jnp.pad(x_cat_p, ((0, B_pad - B), (0, 0)))
            x_cont_p = jnp.pad(x_cont_p, ((0, B_pad - B), (0, 0)))

        cost = pl.CostEstimate(
            flops=2 * B_pad * K_pad * 2 * _DPAD,
            transcendentals=0,
            bytes_accessed=4 * (B_pad * (n_emb + n_cont + OUT_W) + K_pad * 2 * _DPAD))

        slab = pl.pallas_call(
            _make_kernel(TB),
            out_shape=jax.ShapeDtypeStruct((B_pad, OUT_W), jnp.float32),
            grid=(B_pad // TB,),
            in_specs=[
                pl.BlockSpec((TB, n_emb), lambda i: (i, 0)),        # x_cat tile (pre-shifted)
                pl.BlockSpec((TB, n_cont), lambda i: (i, 0)),       # x_cont tile (unpadded)
                pl.BlockSpec((K_pad, 2 * _DPAD), lambda i: (0, 0)), # fused weights, VMEM-resident
            ],
            out_specs=pl.BlockSpec((TB, OUT_W), lambda i: (i, 0)),
            compiler_params=pltpu.CompilerParams(
                dimension_semantics=("parallel",)),
            cost_estimate=cost,
        )(x_cat_p, x_cont_p, W_all)

        x_full = slab[:B, :D]                     # torch.cat([emb(x_cat), x_cont], -1)
        x_cat_emb = x_full[:, :d_emb]             # embedded categoricals
        winners = slab[:B, D:D + 2]               # normalized SOM winner coords
        # TODO(synk): return self.dagmm(x_cat_emb, x_cont, rec_data, winners) — `dagmm`
        # is a constructor-injected submodule with no reference implementation in the prompt.
        return x_cat_emb, x_full, winners

    return forward


if __name__ == "__main__":
    key = jax.random.PRNGKey(0)
    keys = jax.random.split(key, 8)

    B, n_cont = 8, 7
    emb_szs = [(5, 3), (7, 4), (4, 2)]            # (vocab, emb_dim) per categorical column
    d_emb = sum(d for _, d in emb_szs)
    D = d_emb + n_cont                            # 9 + 7 = 16

    x_cat = jax.random.randint(keys[0], (B, len(emb_szs)), 0,
                               jnp.array([v for v, _ in emb_szs]))
    x_cont = jax.random.normal(keys[1], (B, n_cont), jnp.float32)
    rec_data = jax.random.normal(keys[2], (B, D), jnp.float32)
    emb_tables = [jax.random.normal(keys[3 + i], (v, d), jnp.float32)
                  for i, (v, d) in enumerate(emb_szs)]
    # Deterministic in-script SOM weights (replaces pickle.load(save_path)).
    som_weights = jax.random.normal(keys[6], (SOM_X, SOM_Y, D), jnp.float32)

    forward = make_som_dagmm_forward(emb_tables, som_weights, n_cont)
    x_cat_emb, x_full, winners = forward(x_cat, x_cont, rec_data)
    jax.block_until_ready((x_cat_emb, x_full, winners))

    # Pure-JAX reference check of the forward semantics.
    ref_emb = jnp.concatenate([t[x_cat[:, i]] for i, t in enumerate(emb_tables)], -1)
    ref_x = jnp.concatenate([ref_emb, x_cont], -1)
    w = som_weights.reshape(-1, D)
    d2 = jnp.sum((ref_x[:, None, :] - w[None, :, :]) ** 2, -1)
    flat_ref = jnp.argmin(d2, -1)
    ref_win = jnp.stack([flat_ref // SOM_Y, flat_ref % SOM_Y], -1).astype(jnp.float32) / 10.0

    assert x_cat_emb.shape == (B, d_emb) and x_full.shape == (B, D)
    assert winners.shape == (B, 2)
    assert jnp.allclose(x_cat_emb, ref_emb, atol=1e-5)
    assert jnp.allclose(x_full, ref_x, atol=1e-5)
    assert jnp.allclose(winners, ref_win, atol=1e-6)
    print("KERNEL_OK")
</pallas_src>

<mosaic_0001>
module attributes {stable_mosaic.version = 11 : i64} {
  func.func @kernel(%arg0: i32, %arg1: memref<8x3xi32, #tpu.memory_space<vmem>>, %arg2: memref<8x7xf32, #tpu.memory_space<vmem>>, %arg3: memref<24x256xf32, #tpu.memory_space<vmem>>, %arg4: memref<8x24xf32, #tpu.memory_space<vmem>>) attributes {dimension_semantics = [#tpu.dimension_semantics<parallel>], iteration_bounds = array<i64: 1>, scalar_prefetch = 0 : i64, scratch_operands = 0 : i64, tpu.core_type = #tpu.core_type<tc>, window_params = [{transform_indices = @transform_0, window_bounds = array<i64: 8, 3>}, {transform_indices = @transform_1, window_bounds = array<i64: 8, 7>}, {pipeline_mode = #tpu.pipeline_mode<synchronous>, transform_indices = @transform_2, window_bounds = array<i64: 24, 256>}, {transform_indices = @transform_3, window_bounds = array<i64: 8, 24>}]} {
    %0 = tpu.iota {dimensions = array<i32: 1>} : vector<8x17xi32>
    %c7_i32 = arith.constant 7 : i32
    %1 = vector.broadcast %c7_i32 : i32 to vector<8x17xi32>
    %2 = arith.addi %0, %1 : vector<8x17xi32>
    %c23_i32 = arith.constant 23 : i32
    %3 = vector.broadcast %c23_i32 : i32 to vector<8x17xi32>
    %4 = arith.cmpi eq, %2, %3 : vector<8x17xi32>
    %5 = arith.extui %4 : vector<8x17xi1> to vector<8x17xi32>
    %6 = arith.sitofp %5 : vector<8x17xi32> to vector<8x17xf32>
    %c0 = arith.constant 0 : index
    %c0_0 = arith.constant 0 : index
    %7 = vector.load %arg1[%c0, %c0_0] : memref<8x3xi32, #tpu.memory_space<vmem>>, vector<8x3xi32>
    %8 = vector.extract_strided_slice %7 {offsets = [0, 0], sizes = [8, 1], strides = [1, 1]} : vector<8x3xi32> to vector<8x1xi32>
    %9 = vector.broadcast %8 : vector<8x1xi32> to vector<8x17xi32>
    %10 = arith.cmpi eq, %2, %9 : vector<8x17xi32>
    %11 = arith.extui %10 : vector<8x17xi1> to vector<8x17xi32>
    %12 = arith.sitofp %11 : vector<8x17xi32> to vector<8x17xf32>
    %13 = arith.addf %6, %12 : vector<8x17xf32>
    %14 = vector.extract_strided_slice %7 {offsets = [0, 1], sizes = [8, 1], strides = [1, 1]} : vector<8x3xi32> to vector<8x1xi32>
    %15 = vector.broadcast %14 : vector<8x1xi32> to vector<8x17xi32>
    %16 = arith.cmpi eq, %2, %15 : vector<8x17xi32>
    %17 = arith.extui %16 : vector<8x17xi1> to vector<8x17xi32>
    %18 = arith.sitofp %17 : vector<8x17xi32> to vector<8x17xf32>
    %19 = arith.addf %13, %18 : vector<8x17xf32>
    %20 = vector.extract_strided_slice %7 {offsets = [0, 2], sizes = [8, 1], strides = [1, 1]} : vector<8x3xi32> to vector<8x1xi32>
    %21 = vector.broadcast %20 : vector<8x1xi32> to vector<8x17xi32>
    %22 = arith.cmpi eq, %2, %21 : vector<8x17xi32>
    %23 = arith.extui %22 : vector<8x17xi1> to vector<8x17xi32>
    %24 = arith.sitofp %23 : vector<8x17xi32> to vector<8x17xf32>
    %25 = arith.addf %19, %24 : vector<8x17xf32>
    %c0_1 = arith.constant 0 : index
    %c0_2 = arith.constant 0 : index
    %26 = vector.load %arg2[%c0_1, %c0_2] : memref<8x7xf32, #tpu.memory_space<vmem>>, vector<8x7xf32>
    %27 = tpu.concatenate %26, %25 in 1 : vector<8x7xf32>, vector<8x17xf32> -> vector<8x24xf32>
    %c0_3 = arith.constant 0 : index
    %c0_4 = arith.constant 0 : index
    %28 = vector.load %arg3[%c0_3, %c0_4] : memref<24x256xf32, #tpu.memory_space<vmem>>, vector<24x256xf32>
    %cst = arith.constant dense<0.000000e+00> : vector<8x256xf32>
    %29 = tpu.matmul %27, %28, %cst {dimension_numbers = #tpu.dot_dimension_numbers<[1], [0], [0], [1], [0, 0, 1, 1], [], []>} : vector<8x24xf32>, vector<24x256xf32>, vector<8x256xf32> -> vector<8x256xf32>
    %30 = vector.extract_strided_slice %29 {offsets = [0, 0], sizes = [8, 128], strides = [1, 1]} : vector<8x256xf32> to vector<8x128xf32>
    %31 = vector.extract_strided_slice %29 {offsets = [0, 128], sizes = [8, 128], strides = [1, 1]} : vector<8x256xf32> to vector<8x128xf32>
    %cst_5 = arith.constant dense<0x7F800000> : vector<8xf32>
    %32 = vector.multi_reduction <minimumf>, %31, %cst_5 [1] : vector<8x128xf32> to vector<8xf32>
    %33 = vector.shape_cast %32 : vector<8xf32> to vector<8x1xf32>
    %34 = tpu.iota {dimensions = array<i32: 1>} : vector<8x128xi32>
    %35 = vector.broadcast %33 : vector<8x1xf32> to vector<8x128xf32>
    %36 = arith.cmpf ole, %31, %35 : vector<8x128xf32>
    %c128_i32 = arith.constant 128 : i32
    %37 = vector.broadcast %c128_i32 : i32 to vector<8x128xi32>
    %38 = arith.select %36, %34, %37 : vector<8x128xi1>, vector<8x128xi32>
    %cst_6 = arith.constant dense<2147483647> : vector<8xi32>
    %39 = vector.multi_reduction <minsi>, %38, %cst_6 [1] : vector<8x128xi32> to vector<8xi32>
    %40 = vector.shape_cast %39 : vector<8xi32> to vector<8x1xi32>
    %41 = arith.sitofp %40 : vector<8x1xi32> to vector<8x1xf32>
    %cst_7 = arith.constant 1.000000e+01 : f32
    %42 = vector.broadcast %cst_7 : f32 to vector<8x1xf32>
    %43 = arith.divf %41, %42 : vector<8x1xf32>
    %44 = math.floor %43 : vector<8x1xf32>
    %cst_8 = arith.constant 1.000000e+01 : f32
    %45 = vector.broadcast %cst_8 : f32 to vector<8x1xf32>
    %46 = arith.divf %44, %45 : vector<8x1xf32>
    %cst_9 = arith.constant 1.000000e+01 : f32
    %47 = vector.broadcast %cst_9 : f32 to vector<8x1xf32>
    %48 = arith.mulf %44, %47 : vector<8x1xf32>
    %49 = arith.subf %41, %48 : vector<8x1xf32>
    %cst_10 = arith.constant 1.000000e+01 : f32
    %50 = vector.broadcast %cst_10 : f32 to vector<8x1xf32>
    %51 = arith.divf %49, %50 : vector<8x1xf32>
    %52 = tpu.iota {dimensions = array<i32: 1>} : vector<8x24xi32>
    %53 = vector.extract_strided_slice %30 {offsets = [0, 0], sizes = [8, 24], strides = [1, 1]} : vector<8x128xf32> to vector<8x24xf32>
    %c16_i32 = arith.constant 16 : i32
    %54 = vector.broadcast %c16_i32 : i32 to vector<8x24xi32>
    %55 = arith.cmpi eq, %52, %54 : vector<8x24xi32>
    %56 = vector.shape_cast %46 : vector<8x1xf32> to vector<8x1xf32>
    %57 = vector.broadcast %56 : vector<8x1xf32> to vector<8x24xf32>
    %58 = arith.select %55, %57, %53 : vector<8x24xi1>, vector<8x24xf32>
    %c17_i32 = arith.constant 17 : i32
    %59 = vector.broadcast %c17_i32 : i32 to vector<8x24xi32>
    %60 = arith.cmpi eq, %52, %59 : vector<8x24xi32>
    %61 = vector.shape_cast %51 : vector<8x1xf32> to vector<8x1xf32>
    %62 = vector.broadcast %61 : vector<8x1xf32> to vector<8x24xf32>
    %63 = arith.select %60, %62, %58 : vector<8x24xi1>, vector<8x24xf32>
    %c0_11 = arith.constant 0 : index
    %c0_12 = arith.constant 0 : index
    %64 = vector.load %arg4[%c0_11, %c0_12] : memref<8x24xf32, #tpu.memory_space<vmem>>, vector<8x24xf32>
    tpu.vector_store %arg4[%c0_11, %c0_12], %63 {strides = array<i32>} : memref<8x24xf32, #tpu.memory_space<vmem>>, vector<8x24xf32>,
    return
  }
  func.func @transform_0(%arg0: i32) -> (i32, i32) {
    %c0_i32 = arith.constant 0 : i32
    %c0_i32_0 = arith.constant 0 : i32
    return %arg0, %c0_i32 : i32, i32
  }
  func.func @transform_1(%arg0: i32) -> (i32, i32) {
    %c0_i32 = arith.constant 0 : i32
    %c0_i32_0 = arith.constant 0 : i32
    return %arg0, %c0_i32 : i32, i32
  }
  func.func @transform_2(%arg0: i32) -> (i32, i32) {
    %c0_i32 = arith.constant 0 : i32
    %c0_i32_0 = arith.constant 0 : i32
    %c0_i32_1 = arith.constant 0 : i32
    return %c0_i32, %c0_i32_0 : i32, i32
  }
  func.func @transform_3(%arg0: i32) -> (i32, i32) {
    %c0_i32 = arith.constant 0 : i32
    %c0_i32_0 = arith.constant 0 : i32
    return %arg0, %c0_i32 : i32, i32
  }
}

</mosaic_0001>

<llo_original>
// kernel: forward.1
$region0: #{forward.1}
  #allocation0 [shape = 'u32[]', space=smem, size = 0x4, offset = 0x4, fixed_abs, tag = 'smem constant byte address 0x4 - core index']
  #allocation1 [shape = 'u32[144,128]{1,0:T(1,128)}', space=vmem, size = 0x12000, scoped, tag = 'internal scratch']
  %s0 = inlined_call_operand.vmem [shape: s32[8,3], index: 0, kind: input, shape index: {}]
  %s1 = inlined_call_operand.vmem [shape: f32[8,7], index: 1, kind: input, shape index: {}]
  %s2 = inlined_call_operand.hbm [shape: f32[24,256], index: 2, kind: input, shape index: {}]
  %s3 = inlined_call_operand.vmem [shape: f32[8,24], index: 3, kind: output, shape index: {}]
  %s4 = sld [smem:[#allocation0]]
  $region26: #{forward.1} parent=0
    _
  %s6 = ssub.s32 1, %s4
  %s7 = scalar_select 0, %s6, %s4
  $region1: #{forward.1} parent=0
    #allocation2 [shape = 'u8[24576]{0}', space=vmem, size = 0x6000, scoped, tag = 'input window, operand 2, single buffered']
    #allocation3 [shape = 's32[1]{0}', space=sflag, size = 0x4, scoped, tag = 'scoped memory for forward.1']
    %8 = vsyncpa [#allocation3], 0
    // Predicated region
    $region2: #{forward.1} parent=1 // pred_check
      _
    $region3: #{forward.1} parent=1 // pred_check_branch
      %10 = sbr.rel (0) target = $region5
    $region4: #{forward.1} parent=1 // pred_region
      _
    $region5: #{forward.1} parent=1 // pred_fallthru
      _
    // Predicated region
    $region6: #{forward.1} parent=1 // pred_check
      _
    $region7: #{forward.1} parent=1 // pred_check_branch
      %12 = sbr.rel (0) target = $region9
    $region8: #{forward.1} parent=1 // pred_region
      _
    $region9: #{forward.1} parent=1 // pred_fallthru
      _
    // Predicated region
    $region10: #{forward.1} parent=1 // pred_check
      _
    $region11: #{forward.1} parent=1 // pred_check_branch
      %14 = sbr.rel (0) target = $region13
    $region12: #{forward.1} parent=1 // pred_region
      %s16 = ssub.s32 768, 768
      %17 = vsyncadd [#allocation3], %s16
      %s18 = sshll.u32 [#allocation2], 4
      %s19 = int_to_ptr.vmem [resolvable:$true] %s18
      %24 = dma.hbm_to_vmem [thread:$0]  %s2, 768, %s19, [#allocation3], 256, 256, 16
    $region13: #{forward.1} parent=1 // pred_fallthru
      _
    // Predicated region
    $region14: #{forward.1} parent=1 // pred_check
      _
    $region15: #{forward.1} parent=1 // pred_check_branch
      %26 = sbr.rel (0) target = $region17
    $region16: #{forward.1} parent=1 // pred_region
      %27 = dma.done [#allocation3], 768
    $region17: #{forward.1} parent=1 // pred_fallthru
      _
    %v28 = vlaneseq
    %v29 = vand.u32 %v28, 127
    %v30 = vadd.s32 %v29, 7
    %vm31 = vcmp.eq.s32.totalorder %v30, 23
    %v32 = vsel %vm31, 1, 0
    %v33 = vcvt.s32.f32 %v32
    %v34 = vld [vmem:[%s0] sm:$0xff]
    %35 = vset.pattern.permute.xlu0 0
    %36 = vperm.xlu0 %35, %v34
    %v37 = vpop.permute.xlu0 %36
    %vm38 = vcmp.eq.s32.totalorder %v30, %v37
    %v39 = vsel %vm38, 1, 0
    %v40 = vcvt.s32.f32 %v39
    %v41 = vadd.f32 %v33, %v40
    %42 = vset.pattern.permute.xlu0 1
    %43 = vperm.xlu0 %42, %v34
    %v44 = vpop.permute.xlu0 %43
    %vm45 = vcmp.eq.s32.totalorder %v30, %v44
    %v46 = vsel %vm45, 1, 0
    %v47 = vcvt.s32.f32 %v46
    %v48 = vadd.f32 %v41, %v47
    %49 = vset.pattern.permute.xlu0 2
    %50 = vperm.xlu0 %49, %v34
    %v51 = vpop.permute.xlu0 %50
    %vm52 = vcmp.eq.s32.totalorder %v30, %v51
    %v53 = vsel %vm52, 1, 0
    %v54 = vcvt.s32.f32 %v53
    %v55 = vadd.f32 %v48, %v54
    %v56 = vld [vmem:[%s1] sm:$0xff]
    %58 = vrot.lane.b32.xlu0 %v55, 7
    %v59 = vpop.permute.xlu0 %58
    %vm61 = vcmask 56320
    %v62 = vsel %vm61, %v56, %v59
    %v63 = vld [vmem:[#allocation2] sm:$0xff]
    %v64 = vld [vmem:[#allocation2 + $0x8] sm:$0xff]
    %v65 = vld [vmem:[#allocation2 + $0x10] sm:$0xff]
    %v66 = vld [vmem:[#allocation2 + $0x18] sm:$0xff]
    %v67 = vld [vmem:[#allocation2 + $0x20] sm:$0xff]
    %v68 = vld [vmem:[#allocation2 + $0x28] sm:$0xff]
    %vm69 = vcmask 195584
    %v71 = vsel %vm69, %v62, 0
    %73 = vmatprep.subr.mxu0 %v64
    %74 = vmatpush1.msra.mxu0 %v63
    %75 = vmatprep.subr.mxu0 %v66
    %76 = vmatpush1.msra.mxu0 %v65
    %77 = vmatprep.subr.mxu0 %v68
    %78 = vmatpush1.msra.mxu0 %v67
    %79 = vmatprep.subr.mxu0 0.0
    %80 = vmatpush1.msra.mxu0 0.0
    %81 = vmatprep.subr.mxu0 0.0
    %82 = vmatpush1.msra.mxu0 0.0
    %83 = vmatprep.subr.mxu0 0.0
    %84 = vmatpush1.msra.mxu0 0.0
    %85 = vmatprep.subr.mxu0 0.0
    %86 = vmatpush1.msra.mxu0 0.0
    %87 = vmatprep.subr.mxu0 0.0
    %88 = vmatpush1.msra.mxu0 0.0
    %89 = vmatprep.subr.mxu0 0.0
    %90 = vmatpush1.msra.mxu0 0.0
    %91 = vmatprep.subr.mxu0 0.0
    %92 = vmatpush1.msra.mxu0 0.0
    %93 = vmatprep.subr.mxu0 0.0
    %94 = vmatpush1.msra.mxu0 0.0
    %95 = vmatprep.subr.mxu0 0.0
    %96 = vmatpush1.msra.mxu0 0.0
    %97 = vmatprep.subr.mxu0 0.0
    %98 = vmatpush1.msra.mxu0 0.0
    %99 = vmatprep.subr.mxu0 0.0
    %100 = vmatpush1.msra.mxu0 0.0
    %101 = vmatprep.subr.mxu0 0.0
    %102 = vmatpush1.msra.mxu0 0.0
    %103 = vmatprep.subr.mxu0 0.0
    %104 = vmatpush1.msra.mxu0 0.0
    %105 = vmatprep.subr.mxu0 0.0
    %106 = vmatpush1.msra.mxu0 0.0
    %107 = vmatprep.subr.mxu0 0.0
    %108 = vmatpush1.msra.mxu0 0.0
    %109 = vmatprep.subr.mxu0 0.0
    %110 = vmatpush1.msra.mxu0 0.0
    %111 = vmatprep.subr.mxu0 0.0
    %112 = vmatpush1.msra.mxu0 0.0
    %113 = vmatprep.subr.mxu0 0.0
    %114 = vmatpush1.msra.mxu0 0.0
    %115 = vmatprep.subr.mxu0 0.0
    %116 = vmatpush1.msra.mxu0 0.0
    %117 = vmatprep.subr.mxu0 0.0
    %118 = vmatpush1.msra.mxu0 0.0
    %119 = vmatprep.subr.mxu0 0.0
    %120 = vmatpush1.msra.mxu0 0.0
    %121 = vmatprep.subr.mxu0 0.0
    %122 = vmatpush1.msra.mxu0 0.0
    %123 = vmatprep.subr.mxu0 0.0
    %124 = vmatpush1.msra.mxu0 0.0
    %125 = vmatprep.subr.mxu0 0.0
    %126 = vmatpush1.msra.mxu0 0.0
    %127 = vmatprep.subr.mxu0 0.0
    %128 = vmatpush1.msra.mxu0 0.0
    %129 = vmatprep.subr.mxu0 0.0
    %130 = vmatpush1.msra.mxu0 0.0
    %131 = vmatprep.subr.mxu0 0.0
    %132 = vmatpush1.msra.mxu0 0.0
    %133 = vmatprep.subr.mxu0 0.0
    %134 = vmatpush1.msra.mxu0 0.0
    %135 = vmatprep.subr.mxu0 0.0
    %136 = vmatpush1.msra.mxu0 0.0
    %137 = vmatprep.mubr.f32.mxu0 0.0
    %138 = vmatmul.mubr.f32.gmra.mrb[0].mxu0 %v71
    %v139 = vpop.f32.mrb[0].mxu0
    %v140 = vadd.f32 0.0, %v139
    %v141 = vpop.f32.mrb[0].mxu0
    %v142 = vadd.f32 0.0, %v141
    %143 = vdwg.mxu0
    %144 = vmin.xlane.f32.xlu0 %v142
    %v145 = vpop.xlane.xlu0 %144
    %vm146 = vcmp.le.f32.partialorder %v142, %v145
    %v147 = vsel %vm146, %v29, 128
    %v148 = vand.u32 %v147, 65535
    %v149 = vshra.s32 %v147, 16
    %v150 = vcvt.s32.f32 %v148
    %v151 = vcvt.s32.f32 %v149
    %152 = vmin.xlane.f32.xlu0 %v151
    %v153 = vpop.xlane.xlu0 %152
    %vm154 = vcmp.eq.f32.partialorder %v151, %v153
    %v155 = vsel %vm154, %v150, inf
    %156 = vmin.xlane.f32.xlu0 %v155
    %v157 = vpop.xlane.xlu0 %156
    %v158 = vcvt.f32.s32 %v157
    %v159 = vcvt.f32.s32 %v153
    %v160 = vshll.u32 %v159, 16
    %v161 = vadd.s32 %v160, %v158
    %v162 = vcvt.s32.f32 %v161
    %v163 = vrcp.pop 10.0
    %v164 = vmul.f32 %v162, %v163
    %v165 = vfloor.f32 %v164
    %v166 = vmul.f32 %v165, %v163
    %v167 = vmul.f32 %v165, 10.0
    %v168 = vsub.f32 %v162, %v167
    %v169 = vmul.f32 %v168, %v163
    %vm170 = vcmp.eq.s32.totalorder %v29, 16
    %v171 = vsel %vm170, %v166, %v140
    %vm172 = vcmp.eq.s32.totalorder %v29, 17
    %v173 = vsel %vm172, %v169, %v171
    %174 = vst.msk [vmem:[%s3] sm:$0xff] %vm69, %v173
    // Predicated region
    $region18: #{forward.1} parent=1 // pred_check
      _
    $region19: #{forward.1} parent=1 // pred_check_branch
      %176 = sbr.rel (0) target = $region21
    $region20: #{forward.1} parent=1 // pred_region
      _
    $region21: #{forward.1} parent=1 // pred_fallthru
      _
    // Predicated region
    $region22: #{forward.1} parent=1 // pred_check
      _
    $region23: #{forward.1} parent=1 // pred_check_branch
      %178 = sbr.rel (0) target = $region25
    $region24: #{forward.1} parent=1 // pred_region
      _
    $region25: #{forward.1} parent=1 // pred_fallthru
      _
    %179 = vsyncpa [#allocation3], 1

</llo_original>
